<compile_context>
chip_gen: v5e
topology: v5e:2x2
jax: 0.10.0
libtpu: 0.0.40
codegen_flags: <defaults>
</compile_context>

<pallas_src>
import functools
import math

import jax
import jax.numpy as jnp
from jax import lax
from jax.experimental import pallas as pl
from jax.experimental.pallas import tpu as pltpu

BN_EPS = 1e-5


def _pick_tile(n: int) -> int:
    """Point/query tile: multiple of 128 lanes; larger on v6e (128 MiB VMEM)."""
    cap = 256                      # safe for v7x (64 MiB VMEM) and v5e
    try:
        kind = jax.devices()[0].device_kind.lower()
        if "v6" in kind:
            cap = 512              # v6e: bigger tiles get closer to HBM roofline
    except Exception:
        pass
    for t in (512, 256, 128):
        if t <= cap and n % t == 0:
            return t
    return n                       # small / odd N: single tile (full dim)


def _attn_kernel(x_ref, wqk_ref, wv_ref, bv_ref, wt_ref,
                 y_ref, ysum_ref, ysq_ref,
                 k_sc, q_sc, v_sc, acc_sc, *, tq):
    qi = pl.program_id(1)
    nq = pl.num_programs(1)

    # -- per-batch setup: project K/V once, reset the x_s accumulator --------
    @pl.when(qi == 0)
    def _():
        x_bf = x_ref[...].astype(jnp.bfloat16)                        # [C, N]
        k = jnp.dot(wqk_ref[...].astype(jnp.bfloat16), x_bf,
                    preferred_element_type=jnp.float32)               # [da, N]
        k_sc[...] = k.astype(jnp.bfloat16)
        # q in [N, da] layout (one per-batch transpose) so each per-tile
        # energy matmul is a clean [tq, da] @ [da, N] MXU op.
        q_sc[...] = jnp.transpose(k).astype(jnp.bfloat16)             # [N, da]
        v = jnp.dot(wv_ref[...].astype(jnp.bfloat16), x_bf,
                    preferred_element_type=jnp.float32) + bv_ref[...]
        v_sc[...] = v.astype(jnp.bfloat16)                            # [C, N]
        acc_sc[...] = jnp.zeros_like(acc_sc)

    # -- this query tile ------------------------------------------------------
    start = pl.multiple_of(qi * tq, tq)
    q_tile = q_sc[pl.ds(start, tq), :]                                # [tq, da]
    # 1/sqrt(da) is already folded into wqk on the host.
    energy = jnp.dot(q_tile, k_sc[...],
                     preferred_element_type=jnp.float32)              # [tq, N]
    energy = energy - jnp.max(energy, axis=-1, keepdims=True)
    p = jnp.exp(energy)
    attn = p * pl.reciprocal(jnp.sum(p, axis=-1, keepdims=True), approx=True)
    # x_s[:, j] = sum_i v[:, i] * A[i, j]  -> accumulate this tile's rows i.
    v_tile = v_sc[:, pl.ds(start, tq)]                                # [C, tq]
    acc_sc[...] += jnp.dot(v_tile, attn.astype(jnp.bfloat16),
                           preferred_element_type=jnp.float32)        # [C, N]

    # -- per-batch finalize: trans_conv + BN partial statistics ---------------
    @pl.when(qi == nq - 1)
    def _():
        y = jnp.dot(wt_ref[...].astype(jnp.bfloat16),
                    acc_sc[...].astype(jnp.bfloat16),
                    preferred_element_type=jnp.float32)               # [C, N]
        # trans_conv bias omitted: exactly cancelled by training-mode BN
        # mean subtraction.
        y_ref[...] = y
        ysum_ref[...] = jnp.sum(y, axis=-1, keepdims=True)            # [C, 1]
        ysq_ref[...] = jnp.sum(y * y, axis=-1, keepdims=True)         # [C, 1]


def _finish_kernel(x_ref, y_ref, scale_ref, shift_ref, out_ref):
    y = y_ref[...]
    out_ref[...] = x_ref[...] + jnp.maximum(
        y * scale_ref[...] + shift_ref[...], 0.0)


def sa_forward(x, wqk, wv, bv, wt, bt, gamma, beta):
    """PCT SA forward.  x: [B, C, N] channels-first; returns [B, C, N]."""
    del bt  # no-op under training-mode BatchNorm (mean subtraction cancels it)
    B, C, N = x.shape
    da = wqk.shape[0]
    tq = _pick_tile(N)
    nq = N // tq

    # Fold the 1/sqrt(da) attention scale into the tied q/k weight.
    wqk_s = (wqk * (da ** -0.25)).astype(x.dtype)

    vmem_limit = 64 * 1024 * 1024

    # ---- kernel 1: attention + trans_conv + BN partial stats ---------------
    grid_spec = pltpu.PrefetchScalarGridSpec(
        num_scalar_prefetch=0,
        grid=(B, nq),
        in_specs=[
            pl.BlockSpec((None, C, N), lambda b, q: (b, 0, 0)),   # x  (per batch)
            pl.BlockSpec((da, C), lambda b, q: (0, 0)),           # wqk (scaled)
            pl.BlockSpec((C, C), lambda b, q: (0, 0)),            # wv
            pl.BlockSpec((C, 1), lambda b, q: (0, 0)),            # bv
            pl.BlockSpec((C, C), lambda b, q: (0, 0)),            # wt
        ],
        out_specs=[
            pl.BlockSpec((None, C, N), lambda b, q: (b, 0, 0)),   # y (pre-BN)
            pl.BlockSpec((None, C, 1), lambda b, q: (b, 0, 0)),   # sum_n y
            pl.BlockSpec((None, C, 1), lambda b, q: (b, 0, 0)),   # sum_n y^2
        ],
        scratch_shapes=[
            pltpu.VMEM((da, N), jnp.bfloat16),    # k   [da, N]
            pltpu.VMEM((N, da), jnp.bfloat16),    # q = k^T  [N, da]
            pltpu.VMEM((C, N), jnp.bfloat16),     # v   [C, N]
            pltpu.VMEM((C, N), jnp.float32),      # x_s accumulator
        ],
    )
    y, ysum, ysq = pl.pallas_call(
        functools.partial(_attn_kernel, tq=tq),
        out_shape=(
            jax.ShapeDtypeStruct((B, C, N), jnp.float32),
            jax.ShapeDtypeStruct((B, C, 1), jnp.float32),
            jax.ShapeDtypeStruct((B, C, 1), jnp.float32),
        ),
        grid_spec=grid_spec,
        compiler_params=pltpu.CompilerParams(
            dimension_semantics=("parallel", "arbitrary"),
            vmem_limit_bytes=vmem_limit),
    )(x, wqk_s, wv, bv, wt)

    # ---- tiny [C]-sized glue: fold BN stats + gamma/beta into scale/shift ---
    count = B * N
    mean = jnp.sum(ysum, axis=0) / count                 # [C, 1]
    var = jnp.sum(ysq, axis=0) / count - mean * mean     # biased (training mode)
    scale = gamma * lax.rsqrt(var + BN_EPS)              # [C, 1]
    shift = beta - mean * scale                          # [C, 1]

    # ---- kernel 2: out = x + relu(y * scale + shift) ------------------------
    tn = tq
    out = pl.pallas_call(
        _finish_kernel,
        out_shape=jax.ShapeDtypeStruct((B, C, N), x.dtype),
        grid_spec=pltpu.PrefetchScalarGridSpec(
            num_scalar_prefetch=0,
            grid=(B, N // tn),
            in_specs=[
                pl.BlockSpec((None, C, tn), lambda b, j: (b, 0, j)),
                pl.BlockSpec((None, C, tn), lambda b, j: (b, 0, j)),
                pl.BlockSpec((C, 1), lambda b, j: (0, 0)),
                pl.BlockSpec((C, 1), lambda b, j: (0, 0)),
            ],
            out_specs=pl.BlockSpec((None, C, tn), lambda b, j: (b, 0, j)),
        ),
        compiler_params=pltpu.CompilerParams(
            dimension_semantics=("parallel", "parallel"),
            vmem_limit_bytes=vmem_limit),
    )(x, y, scale, shift)
    return out


def sa_reference(x, wqk, wv, bv, wt, bt, gamma, beta):
    """Pure-JAX f32 reference mirroring the PyTorch forward exactly."""
    da = wqk.shape[0]
    q = jnp.einsum('dc,bcn->bdn', wqk, x)               # tied q/k projection
    v = jnp.einsum('oc,bcn->bon', wv, x) + bv[None]
    energy = jnp.einsum('bdn,bdm->bnm', q, q) / math.sqrt(da)
    attention = jax.nn.softmax(energy, axis=-1)
    x_s = jnp.einsum('bcn,bnm->bcm', v, attention)
    yref = jnp.einsum('oc,bcn->bon', wt, x_s) + bt[None]
    mean = jnp.mean(yref, axis=(0, 2), keepdims=True)
    var = jnp.mean((yref - mean) ** 2, axis=(0, 2), keepdims=True)
    y_bn = (yref - mean) / jnp.sqrt(var + BN_EPS) * gamma[None] + beta[None]
    return x + jnp.maximum(y_bn, 0.0)


if __name__ == "__main__":
    B, C, N = 2, 32, 128           # N = 128 keeps the lane (last) dim dense
    da = C // 4

    key = jax.random.PRNGKey(0)
    kx, kq, kv, kbv, kt, kbt, kg, kb = jax.random.split(key, 8)

    x = jax.random.normal(kx, (B, C, N), dtype=jnp.float32)
    s = 1.0 / math.sqrt(C)
    wqk = s * jax.random.normal(kq, (da, C), dtype=jnp.float32)   # tied q/k
    wv = s * jax.random.normal(kv, (C, C), dtype=jnp.float32)
    bv = s * jax.random.normal(kbv, (C, 1), dtype=jnp.float32)
    wt = s * jax.random.normal(kt, (C, C), dtype=jnp.float32)
    bt = s * jax.random.normal(kbt, (C, 1), dtype=jnp.float32)
    gamma = 1.0 + 0.1 * jax.random.normal(kg, (C, 1), dtype=jnp.float32)
    beta = 0.1 * jax.random.normal(kb, (C, 1), dtype=jnp.float32)

    out = jax.block_until_ready(sa_forward(x, wqk, wv, bv, wt, bt, gamma, beta))
    ref = jax.block_until_ready(sa_reference(x, wqk, wv, bv, wt, bt, gamma, beta))

    assert out.shape == (B, C, N)
    rel = float(jnp.linalg.norm(out - ref) / (jnp.linalg.norm(ref) + 1e-12))
    max_abs = float(jnp.max(jnp.abs(out - ref)))
    # bf16 MXU operands (f32 accumulation) -> tolerance relaxed vs f32 reference.
    assert rel < 2e-2 and max_abs < 0.25, (rel, max_abs)
    print("KERNEL_OK")
</pallas_src>

<mosaic_0001>
module attributes {stable_mosaic.version = 11 : i64} {
  func.func @_attn_kernel(%arg0: i32, %arg1: i32, %arg2: memref<1x32x128xf32, #tpu.memory_space<vmem>>, %arg3: memref<8x32xf32, #tpu.memory_space<vmem>>, %arg4: memref<32x32xf32, #tpu.memory_space<vmem>>, %arg5: memref<32x1xf32, #tpu.memory_space<vmem>>, %arg6: memref<32x32xf32, #tpu.memory_space<vmem>>, %arg7: memref<1x32x128xf32, #tpu.memory_space<vmem>>, %arg8: memref<1x32x1xf32, #tpu.memory_space<vmem>>, %arg9: memref<1x32x1xf32, #tpu.memory_space<vmem>>, %arg10: memref<8x128xbf16, #tpu.memory_space<vmem>>, %arg11: memref<128x8xbf16, #tpu.memory_space<vmem>>, %arg12: memref<32x128xbf16, #tpu.memory_space<vmem>>, %arg13: memref<32x128xf32, #tpu.memory_space<vmem>>) attributes {dimension_semantics = [#tpu.dimension_semantics<parallel>, #tpu.dimension_semantics<arbitrary>], iteration_bounds = array<i64: 2, 1>, scalar_prefetch = 0 : i64, scratch_operands = 4 : i64, tpu.core_type = #tpu.core_type<tc>, window_params = [{transform_indices = @transform_0, window_bounds = array<i64: 1, 32, 128>}, {pipeline_mode = #tpu.pipeline_mode<synchronous>, transform_indices = @transform_1, window_bounds = array<i64: 8, 32>}, {pipeline_mode = #tpu.pipeline_mode<synchronous>, transform_indices = @transform_2, window_bounds = array<i64: 32, 32>}, {pipeline_mode = #tpu.pipeline_mode<synchronous>, transform_indices = @transform_3, window_bounds = array<i64: 32, 1>}, {pipeline_mode = #tpu.pipeline_mode<synchronous>, transform_indices = @transform_4, window_bounds = array<i64: 32, 32>}, {transform_indices = @transform_5, window_bounds = array<i64: 1, 32, 128>}, {transform_indices = @transform_6, window_bounds = array<i64: 1, 32, 1>}, {transform_indices = @transform_7, window_bounds = array<i64: 1, 32, 1>}]} {
    %c0_i32 = arith.constant 0 : i32
    %0 = arith.cmpi eq, %arg1, %c0_i32 : i32
    %1 = arith.extui %0 : i1 to i32
    %c0_i32_0 = arith.constant 0 : i32
    %2 = arith.cmpi ne, %1, %c0_i32_0 : i32
    scf.if %2 {
      %c0_13 = arith.constant 0 : index
      %c0_14 = arith.constant 0 : index
      %c0_15 = arith.constant 0 : index
      %29 = vector.load %arg2[%c0_13, %c0_14, %c0_15] : memref<1x32x128xf32, #tpu.memory_space<vmem>>, vector<1x32x128xf32>
      %30 = vector.shape_cast %29 : vector<1x32x128xf32> to vector<32x128xf32>
      %31 = arith.truncf %30 : vector<32x128xf32> to vector<32x128xbf16>
      %c0_16 = arith.constant 0 : index
      %c0_17 = arith.constant 0 : index
      %32 = vector.load %arg3[%c0_16, %c0_17] : memref<8x32xf32, #tpu.memory_space<vmem>>, vector<8x32xf32>
      %33 = arith.truncf %32 : vector<8x32xf32> to vector<8x32xbf16>
      %cst_18 = arith.constant dense<0.000000e+00> : vector<8x128xf32>
      %34 = tpu.matmul %33, %31, %cst_18 {dimension_numbers = #tpu.dot_dimension_numbers<[1], [0], [0], [1], [0, 0, 1, 1], [], []>} : vector<8x32xbf16>, vector<32x128xbf16>, vector<8x128xf32> -> vector<8x128xf32>
      %35 = arith.truncf %34 : vector<8x128xf32> to vector<8x128xbf16>
      %c0_19 = arith.constant 0 : index
      %c0_20 = arith.constant 0 : index
      %36 = vector.load %arg10[%c0_19, %c0_20] : memref<8x128xbf16, #tpu.memory_space<vmem>>, vector<8x128xbf16>
      tpu.vector_store %arg10[%c0_19, %c0_20], %35 {strides = array<i32>} : memref<8x128xbf16, #tpu.memory_space<vmem>>, vector<8x128xbf16>,
      %37 = tpu.transpose %34, [1, 0] : vector<8x128xf32> -> vector<128x8xf32>
      %38 = arith.truncf %37 : vector<128x8xf32> to vector<128x8xbf16>
      %c0_21 = arith.constant 0 : index
      %c0_22 = arith.constant 0 : index
      %39 = vector.load %arg11[%c0_21, %c0_22] : memref<128x8xbf16, #tpu.memory_space<vmem>>, vector<128x8xbf16>
      tpu.vector_store %arg11[%c0_21, %c0_22], %38 {strides = array<i32>} : memref<128x8xbf16, #tpu.memory_space<vmem>>, vector<128x8xbf16>,
      %c0_23 = arith.constant 0 : index
      %c0_24 = arith.constant 0 : index
      %40 = vector.load %arg4[%c0_23, %c0_24] : memref<32x32xf32, #tpu.memory_space<vmem>>, vector<32x32xf32>
      %41 = arith.truncf %40 : vector<32x32xf32> to vector<32x32xbf16>
      %cst_25 = arith.constant dense<0.000000e+00> : vector<32x128xf32>
      %42 = tpu.matmul %41, %31, %cst_25 {dimension_numbers = #tpu.dot_dimension_numbers<[1], [0], [0], [1], [0, 0, 1, 1], [], []>} : vector<32x32xbf16>, vector<32x128xbf16>, vector<32x128xf32> -> vector<32x128xf32>
      %c0_26 = arith.constant 0 : index
      %c0_27 = arith.constant 0 : index
      %43 = vector.load %arg5[%c0_26, %c0_27] : memref<32x1xf32, #tpu.memory_space<vmem>>, vector<32x1xf32>
      %44 = vector.broadcast %43 : vector<32x1xf32> to vector<32x128xf32>
      %45 = arith.addf %42, %44 : vector<32x128xf32>
      %46 = arith.truncf %45 : vector<32x128xf32> to vector<32x128xbf16>
      %c0_28 = arith.constant 0 : index
      %c0_29 = arith.constant 0 : index
      %47 = vector.load %arg12[%c0_28, %c0_29] : memref<32x128xbf16, #tpu.memory_space<vmem>>, vector<32x128xbf16>
      tpu.vector_store %arg12[%c0_28, %c0_29], %46 {strides = array<i32>} : memref<32x128xbf16, #tpu.memory_space<vmem>>, vector<32x128xbf16>,
      %cst_30 = arith.constant 0.000000e+00 : f32
      %48 = vector.broadcast %cst_30 : f32 to vector<32x128xf32>
      %c0_31 = arith.constant 0 : index
      %c0_32 = arith.constant 0 : index
      %49 = vector.load %arg13[%c0_31, %c0_32] : memref<32x128xf32, #tpu.memory_space<vmem>>, vector<32x128xf32>
      tpu.vector_store %arg13[%c0_31, %c0_32], %48 {strides = array<i32>} : memref<32x128xf32, #tpu.memory_space<vmem>>, vector<32x128xf32>,
    } else {
    }
    %c128_i32 = arith.constant 128 : i32
    %3 = arith.muli %arg1, %c128_i32 : i32
    %4 = tpu.assume_multiple %3, 128 : i32
    %5 = arith.index_cast %4 : i32 to index
    %c0 = arith.constant 0 : index
    %6 = vector.load %arg11[%5, %c0] : memref<128x8xbf16, #tpu.memory_space<vmem>>, vector<128x8xbf16>
    %c0_1 = arith.constant 0 : index
    %c0_2 = arith.constant 0 : index
    %7 = vector.load %arg10[%c0_1, %c0_2] : memref<8x128xbf16, #tpu.memory_space<vmem>>, vector<8x128xbf16>
    %cst = arith.constant dense<0.000000e+00> : vector<128x128xf32>
    %8 = tpu.matmul %6, %7, %cst {dimension_numbers = #tpu.dot_dimension_numbers<[1], [0], [0], [1], [0, 0, 1, 1], [], []>} : vector<128x8xbf16>, vector<8x128xbf16>, vector<128x128xf32> -> vector<128x128xf32>
    %cst_3 = arith.constant dense<0xFF800000> : vector<128xf32>
    %9 = vector.multi_reduction <maximumf>, %8, %cst_3 [1] : vector<128x128xf32> to vector<128xf32>
    %10 = vector.shape_cast %9 : vector<128xf32> to vector<128x1xf32>
    %11 = vector.broadcast %10 : vector<128x1xf32> to vector<128x128xf32>
    %12 = arith.subf %8, %11 : vector<128x128xf32>
    %13 = math.exp %12 : vector<128x128xf32>
    %cst_4 = arith.constant dense<0.000000e+00> : vector<128xf32>
    %14 = vector.multi_reduction <add>, %13, %cst_4 [1] : vector<128x128xf32> to vector<128xf32>
    %15 = vector.shape_cast %14 : vector<128xf32> to vector<128x1xf32>
    %16 = tpu.reciprocal %15 {approx = true} : vector<128x1xf32> -> vector<128x1xf32>
    %17 = vector.broadcast %16 : vector<128x1xf32> to vector<128x128xf32>
    %18 = arith.mulf %13, %17 : vector<128x128xf32>
    %c0_5 = arith.constant 0 : index
    %19 = arith.index_cast %4 : i32 to index
    %20 = vector.load %arg12[%c0_5, %19] : memref<32x128xbf16, #tpu.memory_space<vmem>>, vector<32x128xbf16>
    %c0_6 = arith.constant 0 : index
    %c0_7 = arith.constant 0 : index
    %21 = vector.load %arg13[%c0_6, %c0_7] : memref<32x128xf32, #tpu.memory_space<vmem>>, vector<32x128xf32>
    %22 = arith.truncf %18 : vector<128x128xf32> to vector<128x128xbf16>
    %cst_8 = arith.constant dense<0.000000e+00> : vector<32x128xf32>
    %23 = tpu.matmul %20, %22, %cst_8 {dimension_numbers = #tpu.dot_dimension_numbers<[1], [0], [0], [1], [0, 0, 1, 1], [], []>} : vector<32x128xbf16>, vector<128x128xbf16>, vector<32x128xf32> -> vector<32x128xf32>
    %24 = arith.addf %21, %23 : vector<32x128xf32>
    %c0_9 = arith.constant 0 : index
    %c0_10 = arith.constant 0 : index
    %25 = vector.load %arg13[%c0_9, %c0_10] : memref<32x128xf32, #tpu.memory_space<vmem>>, vector<32x128xf32>
    tpu.vector_store %arg13[%c0_9, %c0_10], %24 {strides = array<i32>} : memref<32x128xf32, #tpu.memory_space<vmem>>, vector<32x128xf32>,
    %c0_i32_11 = arith.constant 0 : i32
    %26 = arith.cmpi eq, %arg1, %c0_i32_11 : i32
    %27 = arith.extui %26 : i1 to i32
    %c0_i32_12 = arith.constant 0 : i32
    %28 = arith.cmpi ne, %27, %c0_i32_12 : i32
    scf.if %28 {
      %c0_13 = arith.constant 0 : index
      %c0_14 = arith.constant 0 : index
      %29 = vector.load %arg6[%c0_13, %c0_14] : memref<32x32xf32, #tpu.memory_space<vmem>>, vector<32x32xf32>
      %30 = arith.truncf %29 : vector<32x32xf32> to vector<32x32xbf16>
      %c0_15 = arith.constant 0 : index
      %c0_16 = arith.constant 0 : index
      %31 = vector.load %arg13[%c0_15, %c0_16] : memref<32x128xf32, #tpu.memory_space<vmem>>, vector<32x128xf32>
      %32 = arith.truncf %31 : vector<32x128xf32> to vector<32x128xbf16>
      %cst_17 = arith.constant dense<0.000000e+00> : vector<32x128xf32>
      %33 = tpu.matmul %30, %32, %cst_17 {dimension_numbers = #tpu.dot_dimension_numbers<[1], [0], [0], [1], [0, 0, 1, 1], [], []>} : vector<32x32xbf16>, vector<32x128xbf16>, vector<32x128xf32> -> vector<32x128xf32>
      %c0_18 = arith.constant 0 : index
      %c0_19 = arith.constant 0 : index
      %c0_20 = arith.constant 0 : index
      %34 = vector.load %arg7[%c0_18, %c0_19, %c0_20] : memref<1x32x128xf32, #tpu.memory_space<vmem>>, vector<1x32x128xf32>
      %35 = vector.shape_cast %34 : vector<1x32x128xf32> to vector<32x128xf32>
      %36 = vector.shape_cast %33 : vector<32x128xf32> to vector<1x32x128xf32>
      tpu.vector_store %arg7[%c0_18, %c0_19, %c0_20], %36 {strides = array<i32>} : memref<1x32x128xf32, #tpu.memory_space<vmem>>, vector<1x32x128xf32>,
      %cst_21 = arith.constant dense<0.000000e+00> : vector<32xf32>
      %37 = vector.multi_reduction <add>, %33, %cst_21 [1] : vector<32x128xf32> to vector<32xf32>
      %38 = vector.shape_cast %37 : vector<32xf32> to vector<32x1xf32>
      %c0_22 = arith.constant 0 : index
      %c0_23 = arith.constant 0 : index
      %c0_24 = arith.constant 0 : index
      %39 = vector.load %arg8[%c0_22, %c0_23, %c0_24] : memref<1x32x1xf32, #tpu.memory_space<vmem>>, vector<1x32x1xf32>
      %40 = vector.shape_cast %39 : vector<1x32x1xf32> to vector<32x1xf32>
      %41 = vector.shape_cast %38 : vector<32x1xf32> to vector<1x32x1xf32>
      tpu.vector_store %arg8[%c0_22, %c0_23, %c0_24], %41 {strides = array<i32>} : memref<1x32x1xf32, #tpu.memory_space<vmem>>, vector<1x32x1xf32>,
      %42 = arith.mulf %33, %33 : vector<32x128xf32>
      %cst_25 = arith.constant dense<0.000000e+00> : vector<32xf32>
      %43 = vector.multi_reduction <add>, %42, %cst_25 [1] : vector<32x128xf32> to vector<32xf32>
      %44 = vector.shape_cast %43 : vector<32xf32> to vector<32x1xf32>
      %c0_26 = arith.constant 0 : index
      %c0_27 = arith.constant 0 : index
      %c0_28 = arith.constant 0 : index
      %45 = vector.load %arg9[%c0_26, %c0_27, %c0_28] : memref<1x32x1xf32, #tpu.memory_space<vmem>>, vector<1x32x1xf32>
      %46 = vector.shape_cast %45 : vector<1x32x1xf32> to vector<32x1xf32>
      %47 = vector.shape_cast %44 : vector<32x1xf32> to vector<1x32x1xf32>
      tpu.vector_store %arg9[%c0_26, %c0_27, %c0_28], %47 {strides = array<i32>} : memref<1x32x1xf32, #tpu.memory_space<vmem>>, vector<1x32x1xf32>,
    } else {
    }
    return
  }
  func.func @transform_0(%arg0: i32, %arg1: i32) -> (i32, i32, i32) {
    %c0_i32 = arith.constant 0 : i32
    %c0_i32_0 = arith.constant 0 : i32
    %c0_i32_1 = arith.constant 0 : i32
    return %arg0, %c0_i32, %c0_i32_0 : i32, i32, i32
  }
  func.func @transform_1(%arg0: i32, %arg1: i32) -> (i32, i32) {
    %c0_i32 = arith.constant 0 : i32
    %c0_i32_0 = arith.constant 0 : i32
    %c0_i32_1 = arith.constant 0 : i32
    return %c0_i32, %c0_i32_0 : i32, i32
  }
  func.func @transform_2(%arg0: i32, %arg1: i32) -> (i32, i32) {
    %c0_i32 = arith.constant 0 : i32
    %c0_i32_0 = arith.constant 0 : i32
    %c0_i32_1 = arith.constant 0 : i32
    return %c0_i32, %c0_i32_0 : i32, i32
  }
  func.func @transform_3(%arg0: i32, %arg1: i32) -> (i32, i32) {
    %c0_i32 = arith.constant 0 : i32
    %c0_i32_0 = arith.constant 0 : i32
    %c0_i32_1 = arith.constant 0 : i32
    return %c0_i32, %c0_i32_0 : i32, i32
  }
  func.func @transform_4(%arg0: i32, %arg1: i32) -> (i32, i32) {
    %c0_i32 = arith.constant 0 : i32
    %c0_i32_0 = arith.constant 0 : i32
    %c0_i32_1 = arith.constant 0 : i32
    return %c0_i32, %c0_i32_0 : i32, i32
  }
  func.func @transform_5(%arg0: i32, %arg1: i32) -> (i32, i32, i32) {
    %c0_i32 = arith.constant 0 : i32
    %c0_i32_0 = arith.constant 0 : i32
    %c0_i32_1 = arith.constant 0 : i32
    return %arg0, %c0_i32, %c0_i32_0 : i32, i32, i32
  }
  func.func @transform_6(%arg0: i32, %arg1: i32) -> (i32, i32, i32) {
    %c0_i32 = arith.constant 0 : i32
    %c0_i32_0 = arith.constant 0 : i32
    %c0_i32_1 = arith.constant 0 : i32
    return %arg0, %c0_i32, %c0_i32_0 : i32, i32, i32
  }
  func.func @transform_7(%arg0: i32, %arg1: i32) -> (i32, i32, i32) {
    %c0_i32 = arith.constant 0 : i32
    %c0_i32_0 = arith.constant 0 : i32
    %c0_i32_1 = arith.constant 0 : i32
    return %arg0, %c0_i32, %c0_i32_0 : i32, i32, i32
  }
}

</mosaic_0001>

<llo_original>
// kernel: tpu_custom_call.1
$region0: #{tpu_custom_call.1}
  #allocation0 [shape = 'u32[]', space=smem, size = 0x4, offset = 0x4, fixed_abs, tag = 'smem constant byte address 0x4 - core index']
  #allocation1 [shape = 'u32[72,128]{1,0:T(1,128)}', space=vmem, size = 0x9000, scoped, tag = 'internal scratch']
  #allocation2 [shape = 'bf16[8,128]{1,0:T(8,128)(2,1)}', space=vmem, size = 0x800, scoped, tag = 'scratch operand']
  #allocation3 [shape = 'bf16[128,8]{1,0:T(8,128)(2,1)}', space=vmem, size = 0x8000, scoped, tag = 'scratch operand']
  #allocation4 [shape = 'bf16[32,128]{1,0:T(8,128)(2,1)}', space=vmem, size = 0x2000, scoped, tag = 'scratch operand']
  #allocation5 [shape = 'f32[32,128]{1,0:T(8,128)}', space=vmem, size = 0x4000, scoped, tag = 'scratch operand']
  %s0 = inlined_call_operand.hbm [shape: f32[2,32,128], index: 0, kind: input, shape index: {}]
  %s1 = inlined_call_operand.hbm [shape: f32[8,32], index: 1, kind: input, shape index: {}]
  %s2 = inlined_call_operand.vmem [shape: f32[32,32], index: 2, kind: input, shape index: {}]
  %s3 = inlined_call_operand.vmem [shape: f32[32,1], index: 3, kind: input, shape index: {}]
  %s4 = inlined_call_operand.hbm [shape: f32[32,32], index: 4, kind: input, shape index: {}]
  %s5 = inlined_call_operand.hbm [shape: f32[2,32,128], index: 5, kind: output, shape index: {0}]
  %s6 = inlined_call_operand.vmem [shape: f32[2,32,1], index: 6, kind: output, shape index: {1}]
  %s7 = inlined_call_operand.vmem [shape: f32[2,32,1], index: 7, kind: output, shape index: {2}]
  %8 = xla_tuple %s5, %s6, %s7
  %s9 = sld [smem:[#allocation0]]
  $region89: #{tpu_custom_call.1} parent=0
    _
  %s11 = ssub.s32 1, %s9
  %s12 = scalar_select 0, %s11, %s9
  $region1: #{tpu_custom_call.1} parent=0
    #allocation6 [shape = 'u8[32768]{0}', space=vmem, size = 0x8000, scoped, tag = 'input window, operand 0']
    #allocation7 [shape = 's32[2]{0}', space=sflag, size = 0x8, scoped, tag = 'scoped memory for tpu_custom_call.1']
    #allocation8 [shape = 's32[2]{0}', space=sflag, size = 0x8, scoped, tag = 'scoped memory for tpu_custom_call.1']
    #allocation9 [shape = 'u8[4096]{0}', space=vmem, size = 0x1000, scoped, tag = 'input window, operand 1, single buffered']
    #allocation10 [shape = 's32[1]{0}', space=sflag, size = 0x4, scoped, tag = 'scoped memory for tpu_custom_call.1']
    #allocation11 [shape = 'u8[16384]{0}', space=vmem, size = 0x4000, scoped, tag = 'input window, operand 4, single buffered']
    #allocation12 [shape = 'u8[32768]{0}', space=vmem, size = 0x8000, scoped, tag = 'output window, operand 0']
    %13 = vsyncpa [#allocation7], 0
    %s14 = scalar_lea.sflag [#allocation7], 1
    %15 = vsyncpa %s14, 0
    %16 = vsyncpa [#allocation10], 0
    %17 = vsyncpa [#allocation8], 0
    %s18 = scalar_lea.sflag [#allocation8], 1
    %19 = vsyncpa %s18, 0
    loop: start=0, step=1, limit=4
    $region2: #{tpu_custom_call.1} parent=1 // loop_pre_header
      _
    $region3: #{tpu_custom_call.1} parent=1 // loop_header
      %s21 = sphi 0, %s25
      %p22 = scmp.ge.s32.totalorder %s21, 4
      %s28 = sphi 0, %s40
      %s29 = sphi 0, %s36
      %s30 = sphi 0, %s28
      %s31 = sphi 0, %s29
      %s32 = sphi 0, %s30
      %s33 = sphi 0, %s31
      %s43 = sphi 0, %s45
      %s46 = sphi 0, %s43
      %s47 = sphi 0, %s46
      %s63 = sphi 0, %s47
      %s67 = sphi 0, %s67
      %s69 = sphi 0, %s67
      %s70 = sphi 0, %s69
      %s84 = sphi 0, %s70
      %s88 = sphi 0, %s88
      %s90 = sphi 0, %s88
      %s91 = sphi 0, %s90
      %s105 = sphi 0, %s91
      %s109 = sphi 0, %s109
      %s111 = sphi 0, %s109
      %s112 = sphi 0, %s111
      %s126 = sphi 0, %s112
      %s130 = sphi 0, %s130
      %s132 = sphi 0, %s130
      %s133 = sphi 0, %s132
      %s147 = sphi 0, %s133
      %s153 = sphi 0, %s155
      %s156 = sphi 0, %s153
      %s157 = sphi 0, %s156
      %s173 = sphi 0, %s157
      %s179 = sphi 0, %s181
      %s182 = sphi 0, %s179
      %s183 = sphi 0, %s182
      %s199 = sphi 0, %s183
      %s205 = sphi 0, %s207
      %s208 = sphi 0, %s205
      %s209 = sphi 0, %s208
      %s225 = sphi 0, %s209
    $region4: #{tpu_custom_call.1} parent=1 // loop_header_branch
      %24 = sbr.rel (%p22) target = $region8
    $region5: #{tpu_custom_call.1} parent=1 // loop_body
      %s26 = ssub.s32 %s21, 1
      %s27 = ssub.s32 %s21, 2
      %s34 = sadd.s32 1, %s29
      %p35 = scmp.ge.s32.totalorder %s34, 1
      %s36 = scalar_select %p35, 0, %s34
      %s37 = sadd.s32 1, %s28
      %s38 = scalar_select %p35, %s37, %s28
      %p39 = scmp.ge.s32.totalorder %s38, 2
      %s40 = scalar_select %p39, 0, %s38
      %s41 = ssub.s32 %s28, %s40
      %p42 = scmp.eq.s32.totalorder %s41, 0
      %s44 = sadd.s32 %s43, 1
      %s45 = scalar_select %p42, %s43, %s44
      %p48 = pneg %p42
      %p49 = scmp.eq.s32.totalorder %s21, 1
      %p50 = por %p48, %p49
      %p51 = scmp.ne.s32.totalorder %s43, %s46
      %p52 = scmp.eq.s32.totalorder %s21, 0
      %p53 = por %p51, %p52
      %p54 = scmp.ne.s32.totalorder %s43, %s46
      %p55 = scmp.eq.s32.totalorder %s26, 1
      %p56 = por %p54, %p55
      %p57 = scmp.ne.s32.totalorder %s46, %s47
      %p58 = scmp.eq.s32.totalorder %s26, 0
      %p59 = por %p57, %p58
      %p60 = scmp.ne.s32.totalorder %s46, %s47
      %p61 = scmp.eq.s32.totalorder %s27, 1
      %p62 = por %p60, %p61
      %p64 = scmp.ne.s32.totalorder %s47, %s63
      %p65 = scmp.eq.s32.totalorder %s27, 0
      %p66 = por %p64, %p65
      %s68 = sadd.s32 %s67, 1
      %p71 = scmp.eq.s32.totalorder %s21, 1
      %p72 = scmp.ne.s32.totalorder %s67, %s69
      %p73 = scmp.eq.s32.totalorder %s21, 0
      %p74 = por %p72, %p73
      %p75 = scmp.ne.s32.totalorder %s67, %s69
      %p76 = scmp.eq.s32.totalorder %s26, 1
      %p77 = por %p75, %p76
      %p78 = scmp.ne.s32.totalorder %s69, %s70
      %p79 = scmp.eq.s32.totalorder %s26, 0
      %p80 = por %p78, %p79
      %p81 = scmp.ne.s32.totalorder %s69, %s70
      %p82 = scmp.eq.s32.totalorder %s27, 1
      %p83 = por %p81, %p82
      %p85 = scmp.ne.s32.totalorder %s70, %s84
      %p86 = scmp.eq.s32.totalorder %s27, 0
      %p87 = por %p85, %p86
      %s89 = sadd.s32 %s88, 1
      %p92 = scmp.eq.s32.totalorder %s21, 1
      %p93 = scmp.ne.s32.totalorder %s88, %s90
      %p94 = scmp.eq.s32.totalorder %s21, 0
      %p95 = por %p93, %p94
      %p96 = scmp.ne.s32.totalorder %s88, %s90
      %p97 = scmp.eq.s32.totalorder %s26, 1
      %p98 = por %p96, %p97
      %p99 = scmp.ne.s32.totalorder %s90, %s91
      %p100 = scmp.eq.s32.totalorder %s26, 0
      %p101 = por %p99, %p100
      %p102 = scmp.ne.s32.totalorder %s90, %s91
      %p103 = scmp.eq.s32.totalorder %s27, 1
      %p104 = por %p102, %p103
      %p106 = scmp.ne.s32.totalorder %s91, %s105
      %p107 = scmp.eq.s32.totalorder %s27, 0
      %p108 = por %p106, %p107
      %s110 = sadd.s32 %s109, 1
      %p113 = scmp.eq.s32.totalorder %s21, 1
      %p114 = scmp.ne.s32.totalorder %s109, %s111
      %p115 = scmp.eq.s32.totalorder %s21, 0
      %p116 = por %p114, %p115
      %p117 = scmp.ne.s32.totalorder %s109, %s111
      %p118 = scmp.eq.s32.totalorder %s26, 1
      %p119 = por %p117, %p118
      %p120 = scmp.ne.s32.totalorder %s111, %s112
      %p121 = scmp.eq.s32.totalorder %s26, 0
      %p122 = por %p120, %p121
      %p123 = scmp.ne.s32.totalorder %s111, %s112
      %p124 = scmp.eq.s32.totalorder %s27, 1
      %p125 = por %p123, %p124
      %p127 = scmp.ne.s32.totalorder %s112, %s126
      %p128 = scmp.eq.s32.totalorder %s27, 0
      %p129 = por %p127, %p128
      %s131 = sadd.s32 %s130, 1
      %p134 = scmp.eq.s32.totalorder %s21, 1
      %p135 = scmp.ne.s32.totalorder %s130, %s132
      %p136 = scmp.eq.s32.totalorder %s21, 0
      %p137 = por %p135, %p136
      %p138 = scmp.ne.s32.totalorder %s130, %s132
      %p139 = scmp.eq.s32.totalorder %s26, 1
      %p140 = por %p138, %p139
      %p141 = scmp.ne.s32.totalorder %s132, %s133
      %p142 = scmp.eq.s32.totalorder %s26, 0
      %p143 = por %p141, %p142
      %p144 = scmp.ne.s32.totalorder %s132, %s133
      %p145 = scmp.eq.s32.totalorder %s27, 1
      %p146 = por %p144, %p145
      %p148 = scmp.ne.s32.totalorder %s133, %s147
      %p149 = scmp.eq.s32.totalorder %s27, 0
      %p150 = por %p148, %p149
      %s151 = ssub.s32 %s28, %s40
      %p152 = scmp.eq.s32.totalorder %s151, 0
      %s154 = sadd.s32 %s153, 1
      %s155 = scalar_select %p152, %s153, %s154
      %p158 = pneg %p152
      %p159 = scmp.eq.s32.totalorder %s21, 1
      %p160 = por %p158, %p159
      %p161 = scmp.ne.s32.totalorder %s153, %s156
      %p162 = scmp.eq.s32.totalorder %s21, 0
      %p163 = por %p161, %p162
      %p164 = scmp.ne.s32.totalorder %s153, %s156
      %p165 = scmp.eq.s32.totalorder %s26, 1
      %p166 = por %p164, %p165
      %p167 = scmp.ne.s32.totalorder %s156, %s157
      %p168 = scmp.eq.s32.totalorder %s26, 0
      %p169 = por %p167, %p168
      %p170 = scmp.ne.s32.totalorder %s156, %s157
      %p171 = scmp.eq.s32.totalorder %s27, 1
      %p172 = por %p170, %p171
      %p174 = scmp.ne.s32.totalorder %s157, %s173
      %p175 = scmp.eq.s32.totalorder %s27, 0
      %p176 = por %p174, %p175
      %s177 = ssub.s32 %s28, %s40
      %p178 = scmp.eq.s32.totalorder %s177, 0
      %s180 = sadd.s32 %s179, 1
      %s181 = scalar_select %p178, %s179, %s180
      %p184 = pneg %p178
      %p185 = scmp.eq.s32.totalorder %s21, 1
      %p186 = por %p184, %p185
      %p187 = scmp.ne.s32.totalorder %s179, %s182
      %p188 = scmp.eq.s32.totalorder %s21, 0
      %p189 = por %p187, %p188
      %p190 = scmp.ne.s32.totalorder %s179, %s182
      %p191 = scmp.eq.s32.totalorder %s26, 1
      %p192 = por %p190, %p191
      %p193 = scmp.ne.s32.totalorder %s182, %s183
      %p194 = scmp.eq.s32.totalorder %s26, 0
      %p195 = por %p193, %p194
      %p196 = scmp.ne.s32.totalorder %s182, %s183
      %p197 = scmp.eq.s32.totalorder %s27, 1
      %p198 = por %p196, %p197
      %p200 = scmp.ne.s32.totalorder %s183, %s199
      %p201 = scmp.eq.s32.totalorder %s27, 0
      %p202 = por %p200, %p201
      %s203 = ssub.s32 %s28, %s40
      %p204 = scmp.eq.s32.totalorder %s203, 0
      %s206 = sadd.s32 %s205, 1
      %s207 = scalar_select %p204, %s205, %s206
      %p210 = pneg %p204
      %p211 = scmp.eq.s32.totalorder %s21, 1
      %p212 = por %p210, %p211
      %p213 = scmp.ne.s32.totalorder %s205, %s208
      %p214 = scmp.eq.s32.totalorder %s21, 0
      %p215 = por %p213, %p214
      %p216 = scmp.ne.s32.totalorder %s205, %s208
      %p217 = scmp.eq.s32.totalorder %s26, 1
      %p218 = por %p216, %p217
      %p219 = scmp.ne.s32.totalorder %s208, %s209
      %p220 = scmp.eq.s32.totalorder %s26, 0
      %p221 = por %p219, %p220
      %p222 = scmp.ne.s32.totalorder %s208, %s209
      %p223 = scmp.eq.s32.totalorder %s27, 1
      %p224 = por %p222, %p223
      %p226 = scmp.ne.s32.totalorder %s209, %s225
      %p227 = scmp.eq.s32.totalorder %s27, 0
      %p228 = por %p226, %p227
      %p229 = scmp.le.s32.totalorder 1, %s21
      %p230 = scmp.lt.s32.totalorder %s21, 3
      %p231 = pnand %p229, %p230
      %p232 = pneg %p231
      // Predicated region
      $region9: #{tpu_custom_call.1} parent=5 // pred_check
        _
      $region10: #{tpu_custom_call.1} parent=5 // pred_check_branch
        %234 = sbr.rel (%p231) target = $region12
      $region11: #{tpu_custom_call.1} parent=5 // pred_region
        %s235 = ssub.s32 %s21, 1
        // Predicated region
        $region13: #{tpu_custom_call.1} parent=11 // pred_check
          %p236 = pneg %p80
        $region14: #{tpu_custom_call.1} parent=11 // pred_check_branch
          %238 = sbr.rel (%p236) target = $region16
        $region15: #{tpu_custom_call.1} parent=11 // pred_region
          %240 = vsyncadd [#allocation10], 0
          %s242 = sshll.u32 %s1, 4
          %s243 = int_to_ptr.hbm [resolvable:$true] %s242
          %s244 = sshll.u32 [#allocation9], 4
          %s245 = int_to_ptr.vmem [resolvable:$true] %s244
          %247 = dma.hbm_to_vmem [thread:$0]  %s243, 128, %s245, [#allocation10]
        $region16: #{tpu_custom_call.1} parent=11 // pred_fallthru
          _
        // Predicated region
        $region17: #{tpu_custom_call.1} parent=11 // pred_check
          %p248 = pneg %p101
        $region18: #{tpu_custom_call.1} parent=11 // pred_check_branch
          %250 = sbr.rel (%p248) target = $region20
        $region19: #{tpu_custom_call.1} parent=11 // pred_region
          _
        $region20: #{tpu_custom_call.1} parent=11 // pred_fallthru
          _
        // Predicated region
        $region21: #{tpu_custom_call.1} parent=11 // pred_check
          %p251 = pneg %p122
        $region22: #{tpu_custom_call.1} parent=11 // pred_check_branch
          %253 = sbr.rel (%p251) target = $region24
        $region23: #{tpu_custom_call.1} parent=11 // pred_region
          _
        $region24: #{tpu_custom_call.1} parent=11 // pred_fallthru
          _
        // Predicated region
        $region25: #{tpu_custom_call.1} parent=11 // pred_check
          %p254 = pneg %p143
        $region26: #{tpu_custom_call.1} parent=11 // pred_check_branch
          %256 = sbr.rel (%p254) target = $region28
        $region27: #{tpu_custom_call.1} parent=11 // pred_region
          %258 = vsyncadd [#allocation10], 0
          %s259 = sshll.u32 %s4, 4
          %s260 = int_to_ptr.hbm [resolvable:$true] %s259
          %s261 = sshll.u32 [#allocation11], 4
          %s262 = int_to_ptr.vmem [resolvable:$true] %s261
          %267 = dma.hbm_to_vmem [thread:$0]  %s260, 512, %s262, [#allocation10], 128, 128, 8
        $region28: #{tpu_custom_call.1} parent=11 // pred_fallthru
          _
      $region12: #{tpu_custom_call.1} parent=5 // pred_fallthru
        _
      %p268 = scmp.lt.s32.totalorder %s21, 2
      // Predicated region
      $region29: #{tpu_custom_call.1} parent=5 // pred_check
        %p269 = pneg %p268
      $region30: #{tpu_custom_call.1} parent=5 // pred_check_branch
        %271 = sbr.rel (%p269) target = $region32
      $region31: #{tpu_custom_call.1} parent=5 // pred_region
        // Predicated region
        $region33: #{tpu_custom_call.1} parent=31 // pred_check
          %p272 = pneg %p53
        $region34: #{tpu_custom_call.1} parent=31 // pred_check_branch
          %274 = sbr.rel (%p272) target = $region36
        $region35: #{tpu_custom_call.1} parent=31 // pred_region
          %s275 = sand.u32 %s43, 1
          %s276 = scalar_lea.sflag [#allocation7], %s275
          %s277 = sand.u32 %s43, 1
          %s278 = smul.addr %s277, 32
          %s279 = scalar_lea.vmem [#allocation6], %s278
          %281 = vsyncadd %s276, 0
          %s282 = smul.addr %s28, 4
          %s283 = smul.addr %s282, 8
          %s284 = scalar_lea.hbm %s0, %s283
          %s285 = sshll.u32 %s284, 4
          %s286 = int_to_ptr.hbm [resolvable:$true] %s285
          %s287 = sshll.u32 %s279, 4
          %s288 = int_to_ptr.vmem [resolvable:$true] %s287
          %293 = dma.hbm_to_vmem [thread:$0]  %s286, 512, %s288, %s276, 128, 128, 8
        $region36: #{tpu_custom_call.1} parent=31 // pred_fallthru
          _
      $region32: #{tpu_custom_call.1} parent=5 // pred_fallthru
        _
      %p294 = scmp.le.s32.totalorder 1, %s21
      %p295 = scmp.lt.s32.totalorder %s21, 3
      %p296 = pnand %p294, %p295
      %p297 = pneg %p296
      // Predicated region
      $region37: #{tpu_custom_call.1} parent=5 // pred_check
        _
      $region38: #{tpu_custom_call.1} parent=5 // pred_check_branch
        %299 = sbr.rel (%p296) target = $region40
      $region39: #{tpu_custom_call.1} parent=5 // pred_region
        %s300 = ssub.s32 %s21, 1
        %s301 = sand.u32 %s46, 1
        %s302 = scalar_lea.sflag [#allocation7], %s301
        %s303 = sand.u32 %s46, 1
        %s304 = smul.addr %s303, 32
        %s305 = scalar_lea.vmem [#allocation6], %s304
        // Predicated region
        $region41: #{tpu_custom_call.1} parent=39 // pred_check
          %p306 = pneg %p59
        $region42: #{tpu_custom_call.1} parent=39 // pred_check_branch
          %308 = sbr.rel (%p306) target = $region44
        $region43: #{tpu_custom_call.1} parent=39 // pred_region
          %310 = dma.done %s302, 512
        $region44: #{tpu_custom_call.1} parent=39 // pred_fallthru
          _
        // Predicated region
        $region45: #{tpu_custom_call.1} parent=39 // pred_check
          %p311 = pneg %p80
        $region46: #{tpu_custom_call.1} parent=39 // pred_check_branch
          %313 = sbr.rel (%p311) target = $region48
        $region47: #{tpu_custom_call.1} parent=39 // pred_region
          %315 = dma.done [#allocation10], 128
        $region48: #{tpu_custom_call.1} parent=39 // pred_fallthru
          _
        // Predicated region
        $region49: #{tpu_custom_call.1} parent=39 // pred_check
          %p316 = pneg %p143
        $region50: #{tpu_custom_call.1} parent=39 // pred_check_branch
          %318 = sbr.rel (%p316) target = $region52
        $region51: #{tpu_custom_call.1} parent=39 // pred_region
          %320 = dma.done [#allocation10], 512
        $region52: #{tpu_custom_call.1} parent=39 // pred_fallthru
          _
        %s321 = sand.u32 %s46, 1
        %s322 = scalar_lea.sflag [#allocation7], %s321
        %s323 = sand.u32 %s46, 1
        %s324 = smul.addr %s323, 32
        %s325 = scalar_lea.vmem [#allocation6], %s324
        %p326 = pneg %p59
        %p327 = pneg %p56
        %p328 = pneg %p80
        %p329 = pneg %p77
        %p330 = pneg %p101
        %p331 = pneg %p98
        %p332 = pneg %p122
        %p333 = pneg %p119
        %p334 = pneg %p143
        %p335 = pneg %p140
        %p336 = pneg %p169
        %p337 = pneg %p166
        %s338 = sand.u32 %s156, 1
        %s339 = scalar_lea.sflag [#allocation8], %s338
        %s340 = sand.u32 %s156, 1
        %s341 = smul.addr %s340, 32
        %s342 = scalar_lea.vmem [#allocation12], %s341
        %p343 = pneg %p195
        %p344 = pneg %p192
        %p345 = scmp.lt.s32.totalorder %s30, 1
        %s346 = scalar_select %p345, %s30, 1
        %s347 = smul.addr %s346, 4
        %s348 = smul.addr %s347, 8
        %s349 = scalar_lea.vmem %s6, %s348
        %p350 = pneg %p221
        %p351 = pneg %p218
        %p352 = scmp.lt.s32.totalorder %s30, 1
        %s353 = scalar_select %p352, %s30, 1
        %s354 = smul.addr %s353, 4
        %s355 = smul.addr %s354, 8
        %s356 = scalar_lea.vmem %s7, %s355
        %p357 = scmp.lt.s32.totalorder %s30, 1
        %s358 = scalar_select %p357, %s30, 1
        %s359 = smul.addr %s358, 4
        %s360 = smul.addr %s359, 8
        %s361 = scalar_lea.vmem %s6, %s360
        %p362 = scmp.lt.s32.totalorder %s30, 1
        %s363 = scalar_select %p362, %s30, 1
        %s364 = smul.addr %s363, 4
        %s365 = smul.addr %s364, 8
        %s366 = scalar_lea.vmem %s7, %s365
        %p368 = scmp.eq.s32.totalorder %s31, 0
        // Predicated region
        $region53: #{tpu_custom_call.1} parent=39 // pred_check
          %p369 = pneg %p368
        $region54: #{tpu_custom_call.1} parent=39 // pred_check_branch
          %371 = sbr.rel (%p369) target = $region56
        $region55: #{tpu_custom_call.1} parent=39 // pred_region
          %v372 = vld [vmem:[%s305] sm:$0xff]
          %v373 = vld [vmem:[%s305 + $0x8] sm:$0xff]
          %v374 = vld [vmem:[%s305 + $0x10] sm:$0xff]
          %v375 = vld [vmem:[%s305 + $0x18] sm:$0xff]
          %v376 = vpack.c.bf16 %v373, %v372
          %v377 = vpack.c.bf16 %v375, %v374
          %v378 = vld [vmem:[#allocation9] sm:$0xff]
          %v379 = vpack.c.bf16 %v378, %v378
          %vm380 = vcmask 261120
          %v382 = vsel %vm380, %v379, 0
          %384 = vmatpush.bf16.msra.mxu0 0
          %385 = vmatpush.bf16.msra.mxu0 0
          %386 = vmatpush.bf16.msra.mxu0 0
          %387 = vmatpush.bf16.msra.mxu0 0
          %388 = vmatpush.bf16.msra.mxu0 0
          %389 = vmatpush.bf16.msra.mxu0 0
          %390 = vmatpush.bf16.msra.mxu0 %v377
          %391 = vmatpush.bf16.msra.mxu0 %v376
          %392 = vmatmul.bf16.gmra.mxu0 %v382
          %v393 = vpop.f32.mrf.mxu0
          %v394 = vadd.f32 0.0, %v393
          %v395 = vpop.f32.mrf.mxu0
          %396 = vdwg.mxu0
          %v397 = vpack.c.bf16 %v394, %v394
          %398 = vst [vmem:[#allocation2] sm:$0xf] %v397
          %399 = vxpose.xlu0.b32.start [1/16] %v394, 128
          %400 = vxpose.xlu0.b32.cont [2/16] 0.0, 128
          %401 = vxpose.xlu0.b32.cont [3/16] 0.0, 128
          %402 = vxpose.xlu0.b32.cont [4/16] 0.0, 128
          %403 = vxpose.xlu0.b32.cont [5/16] 0.0, 128
          %404 = vxpose.xlu0.b32.cont [6/16] 0.0, 128
          %405 = vxpose.xlu0.b32.cont [7/16] 0.0, 128
          %406 = vxpose.xlu0.b32.cont [8/16] 0.0, 128
          %407 = vxpose.xlu0.b32.cont [9/16] 0.0, 128
          %408 = vxpose.xlu0.b32.cont [10/16] 0.0, 128
          %409 = vxpose.xlu0.b32.cont [11/16] 0.0, 128
          %410 = vxpose.xlu0.b32.cont [12/16] 0.0, 128
          %411 = vxpose.xlu0.b32.cont [13/16] 0.0, 128
          %412 = vxpose.xlu0.b32.cont [14/16] 0.0, 128
          %413 = vxpose.xlu0.b32.cont [15/16] 0.0, 128
          %414 = vxpose.xlu0.b32.end [16/16] 0.0, 128
          %v415 = vpop.trf.xlu0
          %v416 = vpop.trf.xlu0
          %v417 = vpop.trf.xlu0
          %v418 = vpop.trf.xlu0
          %v419 = vpop.trf.xlu0
          %v420 = vpop.trf.xlu0
          %v421 = vpop.trf.xlu0
          %v422 = vpop.trf.xlu0
          %v423 = vpop.trf.xlu0
          %v424 = vpop.trf.xlu0
          %v425 = vpop.trf.xlu0
          %v426 = vpop.trf.xlu0
          %v427 = vpop.trf.xlu0
          %v428 = vpop.trf.xlu0
          %v429 = vpop.trf.xlu0
          %v430 = vpop.trf.xlu0
          %v431 = vpack.c.bf16 %v415, %v415
          %v432 = vpack.c.bf16 %v416, %v416
          %v433 = vpack.c.bf16 %v417, %v417
          %v434 = vpack.c.bf16 %v418, %v418
          %v435 = vpack.c.bf16 %v419, %v419
          %v436 = vpack.c.bf16 %v420, %v420
          %v437 = vpack.c.bf16 %v421, %v421
          %v438 = vpack.c.bf16 %v422, %v422
          %v439 = vpack.c.bf16 %v423, %v423
          %v440 = vpack.c.bf16 %v424, %v424
          %v441 = vpack.c.bf16 %v425, %v425
          %v442 = vpack.c.bf16 %v426, %v426
          %v443 = vpack.c.bf16 %v427, %v427
          %v444 = vpack.c.bf16 %v428, %v428
          %v445 = vpack.c.bf16 %v429, %v429
          %v446 = vpack.c.bf16 %v430, %v430
          %vm447 = vcmask 60416
          %448 = vst.msk [vmem:[#allocation3] sm:$0xf] %vm447, %v431
          %449 = vst.msk [vmem:[#allocation3 + $0x4] sm:$0xf] %vm447, %v432
          %450 = vst.msk [vmem:[#allocation3 + $0x8] sm:$0xf] %vm447, %v433
          %451 = vst.msk [vmem:[#allocation3 + $0xc] sm:$0xf] %vm447, %v434
          %452 = vst.msk [vmem:[#allocation3 + $0x10] sm:$0xf] %vm447, %v435
          %453 = vst.msk [vmem:[#allocation3 + $0x14] sm:$0xf] %vm447, %v436
          %454 = vst.msk [vmem:[#allocation3 + $0x18] sm:$0xf] %vm447, %v437
          %455 = vst.msk [vmem:[#allocation3 + $0x1c] sm:$0xf] %vm447, %v438
          %456 = vst.msk [vmem:[#allocation3 + $0x20] sm:$0xf] %vm447, %v439
          %457 = vst.msk [vmem:[#allocation3 + $0x24] sm:$0xf] %vm447, %v440
          %458 = vst.msk [vmem:[#allocation3 + $0x28] sm:$0xf] %vm447, %v441
          %459 = vst.msk [vmem:[#allocation3 + $0x2c] sm:$0xf] %vm447, %v442
          %460 = vst.msk [vmem:[#allocation3 + $0x30] sm:$0xf] %vm447, %v443
          %461 = vst.msk [vmem:[#allocation3 + $0x34] sm:$0xf] %vm447, %v444
          %462 = vst.msk [vmem:[#allocation3 + $0x38] sm:$0xf] %vm447, %v445
          %463 = vst.msk [vmem:[#allocation3 + $0x3c] sm:$0xf] %vm447, %v446
          %v464 = vld [vmem:[%s2] sm:$0xff]
          %v465 = vld [vmem:[%s2 + $0x8] sm:$0xff]
          %v466 = vld [vmem:[%s2 + $0x10] sm:$0xff]
          %v467 = vld [vmem:[%s2 + $0x18] sm:$0xff]
          %v468 = vpack.c.bf16 %v465, %v464
          %v469 = vpack.c.bf16 %v467, %v466
          %v470 = vld [vmem:[%s3] sm:$0xff]
          %v471 = vld [vmem:[%s3 + $0x8] sm:$0xff]
          %v472 = vld [vmem:[%s3 + $0x10] sm:$0xff]
          %v473 = vld [vmem:[%s3 + $0x18] sm:$0xff]
          %475 = vset.pattern.permute.xlu0 0
          %476 = vperm.xlu0 %475, %v470
          %v477 = vpop.permute.xlu0 %476
          %480 = vset.pattern.permute.xlu0 0
          %481 = vperm.xlu0 %480, %v471
          %v482 = vpop.permute.xlu0 %481
          %485 = vset.pattern.permute.xlu0 0
          %486 = vperm.xlu0 %485, %v472
          %v487 = vpop.permute.xlu0 %486
          %490 = vset.pattern.permute.xlu0 0
          %491 = vperm.xlu0 %490, %v473
          %v492 = vpop.permute.xlu0 %491
          %v495 = vsel %vm380, %v468, 0
          %v498 = vsel %vm380, %v469, 0
          %500 = vmatpush.bf16.msra.mxu0 0
          %501 = vmatpush.bf16.msra.mxu0 0
          %502 = vmatpush.bf16.msra.mxu0 0
          %503 = vmatpush.bf16.msra.mxu0 0
          %504 = vmatpush.bf16.msra.mxu0 0
          %505 = vmatpush.bf16.msra.mxu0 0
          %506 = vmatpush.bf16.msra.mxu0 %v377
          %507 = vmatpush.bf16.msra.mxu0 %v376
          %508 = vmatmul.bf16.gmra.mxu0 %v495
          %v509 = vpop.f32.mrf.mxu0
          %v510 = vadd.f32 %v477, %v509
          %v511 = vpop.f32.mrf.mxu0
          %v512 = vadd.f32 %v482, %v511
          %513 = vmatmul.bf16.gmra.mxu0 %v498
          %v514 = vpop.f32.mrf.mxu0
          %v515 = vadd.f32 %v487, %v514
          %v516 = vpop.f32.mrf.mxu0
          %v517 = vadd.f32 %v492, %v516
          %518 = vdwg.mxu0
          %v519 = vpack.c.bf16 %v510, %v510
          %v520 = vpack.c.bf16 %v512, %v512
          %v521 = vpack.c.bf16 %v515, %v515
          %v522 = vpack.c.bf16 %v517, %v517
          %523 = vst [vmem:[#allocation4] sm:$0xf] %v519
          %524 = vst [vmem:[#allocation4 + $0x4] sm:$0xf] %v520
          %525 = vst [vmem:[#allocation4 + $0x8] sm:$0xf] %v521
          %526 = vst [vmem:[#allocation4 + $0xc] sm:$0xf] %v522
          %527 = vst [vmem:[#allocation5] sm:$0xff] 0.0
          %528 = vst [vmem:[#allocation5 + $0x8] sm:$0xff] 0.0
          %529 = vst [vmem:[#allocation5 + $0x10] sm:$0xff] 0.0
          %530 = vst [vmem:[#allocation5 + $0x18] sm:$0xff] 0.0
        $region56: #{tpu_custom_call.1} parent=39 // pred_fallthru
          _
        %s531 = smul.u32 %s31, 128
        %s532 = sshra.s32 %s531, 3
        %s533 = sand.u32 %s531, 7
        %s534 = smul.addr %s532, 4
        %s535 = scalar_lea.vmem [#allocation3], %s534
        %v536 = vld [vmem:[%s535] sm:$0xf]
        %v537 = vld [vmem:[%s535 + $0x4] sm:$0xf]
        %v538 = vld [vmem:[%s535 + $0x8] sm:$0xf]
        %v539 = vld [vmem:[%s535 + $0xc] sm:$0xf]
        %v540 = vld [vmem:[%s535 + $0x10] sm:$0xf]
        %v541 = vld [vmem:[%s535 + $0x14] sm:$0xf]
        %v542 = vld [vmem:[%s535 + $0x18] sm:$0xf]
        %v543 = vld [vmem:[%s535 + $0x1c] sm:$0xf]
        %v544 = vld [vmem:[%s535 + $0x20] sm:$0xf]
        %v545 = vld [vmem:[%s535 + $0x24] sm:$0xf]
        %v546 = vld [vmem:[%s535 + $0x28] sm:$0xf]
        %v547 = vld [vmem:[%s535 + $0x2c] sm:$0xf]
        %v548 = vld [vmem:[%s535 + $0x30] sm:$0xf]
        %v549 = vld [vmem:[%s535 + $0x34] sm:$0xf]
        %v550 = vld [vmem:[%s535 + $0x38] sm:$0xf]
        %v551 = vld [vmem:[%s535 + $0x3c] sm:$0xf]
        %v552 = vld [vmem:[#allocation2] sm:$0xf]
        %v569 = vunpack.c.l.b16 %v536
        %v570 = vunpack.c.l.b16 %v537
        %v571 = vunpack.c.l.b16 %v538
        %v572 = vunpack.c.l.b16 %v539
        %v573 = vunpack.c.l.b16 %v540
        %v574 = vunpack.c.l.b16 %v541
        %v575 = vunpack.c.l.b16 %v542
        %v576 = vunpack.c.l.b16 %v543
        %v577 = vunpack.c.l.b16 %v544
        %v578 = vunpack.c.l.b16 %v545
        %v579 = vunpack.c.l.b16 %v546
        %v580 = vunpack.c.l.b16 %v547
        %v581 = vunpack.c.l.b16 %v548
        %v582 = vunpack.c.l.b16 %v549
        %v583 = vunpack.c.l.b16 %v550
        %v584 = vunpack.c.l.b16 %v551
        %v585 = vpack.c.b16 %v570, %v569
        %v586 = vpack.c.b16 %v572, %v571
        %v587 = vpack.c.b16 %v574, %v573
        %v588 = vpack.c.b16 %v576, %v575
        %v589 = vpack.c.b16 %v578, %v577
        %v590 = vpack.c.b16 %v580, %v579
        %v591 = vpack.c.b16 %v582, %v581
        %v592 = vpack.c.b16 %v584, %v583
        %vm593 = vcmask 64512
        %v595 = vsel %vm593, %v585, 0
        %v598 = vsel %vm593, %v586, 0
        %v601 = vsel %vm593, %v587, 0
        %v604 = vsel %vm593, %v588, 0
        %v607 = vsel %vm593, %v589, 0
        %v610 = vsel %vm593, %v590, 0
        %v613 = vsel %vm593, %v591, 0
        %v616 = vsel %vm593, %v592, 0
        %vm618 = vcmask 1043456
        %v620 = vsel %vm618, %v552, 0
        %622 = vmatpush.bf16.msra.mxu0 0
        %623 = vmatpush.bf16.msra.mxu0 0
        %624 = vmatpush.bf16.msra.mxu0 0
        %625 = vmatpush.bf16.msra.mxu0 0
        %626 = vmatpush.bf16.msra.mxu0 0
        %627 = vmatpush.bf16.msra.mxu0 0
        %628 = vmatpush.bf16.msra.mxu0 0
        %629 = vmatpush.bf16.msra.mxu0 %v620
        %630 = vmatmul.bf16.gmra.mxu0 %v595
        %v631 = vpop.f32.mrf.mxu0
        %v632 = vadd.f32 0.0, %v631
        %v633 = vpop.f32.mrf.mxu0
        %v634 = vadd.f32 0.0, %v633
        %635 = vmatmul.bf16.gmra.mxu0 %v598
        %v636 = vpop.f32.mrf.mxu0
        %v637 = vadd.f32 0.0, %v636
        %v638 = vpop.f32.mrf.mxu0
        %v639 = vadd.f32 0.0, %v638
        %640 = vmatmul.bf16.gmra.mxu0 %v601
        %v641 = vpop.f32.mrf.mxu0
        %v642 = vadd.f32 0.0, %v641
        %v643 = vpop.f32.mrf.mxu0
        %v644 = vadd.f32 0.0, %v643
        %645 = vmatmul.bf16.gmra.mxu0 %v604
        %v646 = vpop.f32.mrf.mxu0
        %v647 = vadd.f32 0.0, %v646
        %v648 = vpop.f32.mrf.mxu0
        %v649 = vadd.f32 0.0, %v648
        %650 = vmatmul.bf16.gmra.mxu0 %v607
        %v651 = vpop.f32.mrf.mxu0
        %v652 = vadd.f32 0.0, %v651
        %v653 = vpop.f32.mrf.mxu0
        %v654 = vadd.f32 0.0, %v653
        %655 = vmatmul.bf16.gmra.mxu0 %v610
        %v656 = vpop.f32.mrf.mxu0
        %v657 = vadd.f32 0.0, %v656
        %v658 = vpop.f32.mrf.mxu0
        %v659 = vadd.f32 0.0, %v658
        %660 = vmatmul.bf16.gmra.mxu0 %v613
        %v661 = vpop.f32.mrf.mxu0
        %v662 = vadd.f32 0.0, %v661
        %v663 = vpop.f32.mrf.mxu0
        %v664 = vadd.f32 0.0, %v663
        %665 = vmatmul.bf16.gmra.mxu0 %v616
        %v666 = vpop.f32.mrf.mxu0
        %v667 = vadd.f32 0.0, %v666
        %v668 = vpop.f32.mrf.mxu0
        %v669 = vadd.f32 0.0, %v668
        %670 = vdwg.mxu0
        %671 = vmax.xlane.f32.xlu0 %v632
        %v672 = vpop.xlane.xlu0 %671
        %673 = vmax.xlane.f32.xlu0 %v634
        %v674 = vpop.xlane.xlu0 %673
        %675 = vmax.xlane.f32.xlu0 %v637
        %v676 = vpop.xlane.xlu0 %675
        %677 = vmax.xlane.f32.xlu0 %v639
        %v678 = vpop.xlane.xlu0 %677
        %679 = vmax.xlane.f32.xlu0 %v642
        %v680 = vpop.xlane.xlu0 %679
        %681 = vmax.xlane.f32.xlu0 %v644
        %v682 = vpop.xlane.xlu0 %681
        %683 = vmax.xlane.f32.xlu0 %v647
        %v684 = vpop.xlane.xlu0 %683
        %685 = vmax.xlane.f32.xlu0 %v649
        %v686 = vpop.xlane.xlu0 %685
        %687 = vmax.xlane.f32.xlu0 %v652
        %v688 = vpop.xlane.xlu0 %687
        %689 = vmax.xlane.f32.xlu0 %v654
        %v690 = vpop.xlane.xlu0 %689
        %691 = vmax.xlane.f32.xlu0 %v657
        %v692 = vpop.xlane.xlu0 %691
        %693 = vmax.xlane.f32.xlu0 %v659
        %v694 = vpop.xlane.xlu0 %693
        %695 = vmax.xlane.f32.xlu0 %v662
        %v696 = vpop.xlane.xlu0 %695
        %697 = vmax.xlane.f32.xlu0 %v664
        %v698 = vpop.xlane.xlu0 %697
        %699 = vmax.xlane.f32.xlu0 %v667
        %v700 = vpop.xlane.xlu0 %699
        %701 = vmax.xlane.f32.xlu0 %v669
        %v702 = vpop.xlane.xlu0 %701
        %v703 = vsub.f32 %v632, %v672
        %v704 = vsub.f32 %v634, %v674
        %v705 = vsub.f32 %v637, %v676
        %v706 = vsub.f32 %v639, %v678
        %v707 = vsub.f32 %v642, %v680
        %v708 = vsub.f32 %v644, %v682
        %v709 = vsub.f32 %v647, %v684
        %v710 = vsub.f32 %v649, %v686
        %v711 = vsub.f32 %v652, %v688
        %v712 = vsub.f32 %v654, %v690
        %v713 = vsub.f32 %v657, %v692
        %v714 = vsub.f32 %v659, %v694
        %v715 = vsub.f32 %v662, %v696
        %v716 = vsub.f32 %v664, %v698
        %v717 = vsub.f32 %v667, %v700
        %v718 = vsub.f32 %v669, %v702
        %v719 = vmul.f32 %v703, 1.442695
        %v720 = vpow.pop %v719
        %v721 = vmul.f32 %v704, 1.442695
        %v722 = vpow.pop %v721
        %v723 = vmul.f32 %v705, 1.442695
        %v724 = vpow.pop %v723
        %v725 = vmul.f32 %v706, 1.442695
        %v726 = vpow.pop %v725
        %v727 = vmul.f32 %v707, 1.442695
        %v728 = vpow.pop %v727
        %v729 = vmul.f32 %v708, 1.442695
        %v730 = vpow.pop %v729
        %v731 = vmul.f32 %v709, 1.442695
        %v732 = vpow.pop %v731
        %v733 = vmul.f32 %v710, 1.442695
        %v734 = vpow.pop %v733
        %v735 = vmul.f32 %v711, 1.442695
        %v736 = vpow.pop %v735
        %v737 = vmul.f32 %v712, 1.442695
        %v738 = vpow.pop %v737
        %v739 = vmul.f32 %v713, 1.442695
        %v740 = vpow.pop %v739
        %v741 = vmul.f32 %v714, 1.442695
        %v742 = vpow.pop %v741
        %v743 = vmul.f32 %v715, 1.442695
        %v744 = vpow.pop %v743
        %v745 = vmul.f32 %v716, 1.442695
        %v746 = vpow.pop %v745
        %v747 = vmul.f32 %v717, 1.442695
        %v748 = vpow.pop %v747
        %v749 = vmul.f32 %v718, 1.442695
        %v750 = vpow.pop %v749
        %751 = vadd.xlane.f32.xlu0 %v720
        %v752 = vpop.xlane.xlu0 %751
        %753 = vadd.xlane.f32.xlu0 %v722
        %v754 = vpop.xlane.xlu0 %753
        %755 = vadd.xlane.f32.xlu0 %v724
        %v756 = vpop.xlane.xlu0 %755
        %757 = vadd.xlane.f32.xlu0 %v726
        %v758 = vpop.xlane.xlu0 %757
        %759 = vadd.xlane.f32.xlu0 %v728
        %v760 = vpop.xlane.xlu0 %759
        %761 = vadd.xlane.f32.xlu0 %v730
        %v762 = vpop.xlane.xlu0 %761
        %763 = vadd.xlane.f32.xlu0 %v732
        %v764 = vpop.xlane.xlu0 %763
        %765 = vadd.xlane.f32.xlu0 %v734
        %v766 = vpop.xlane.xlu0 %765
        %767 = vadd.xlane.f32.xlu0 %v736
        %v768 = vpop.xlane.xlu0 %767
        %769 = vadd.xlane.f32.xlu0 %v738
        %v770 = vpop.xlane.xlu0 %769
        %771 = vadd.xlane.f32.xlu0 %v740
        %v772 = vpop.xlane.xlu0 %771
        %773 = vadd.xlane.f32.xlu0 %v742
        %v774 = vpop.xlane.xlu0 %773
        %775 = vadd.xlane.f32.xlu0 %v744
        %v776 = vpop.xlane.xlu0 %775
        %777 = vadd.xlane.f32.xlu0 %v746
        %v778 = vpop.xlane.xlu0 %777
        %779 = vadd.xlane.f32.xlu0 %v748
        %v780 = vpop.xlane.xlu0 %779
        %781 = vadd.xlane.f32.xlu0 %v750
        %v782 = vpop.xlane.xlu0 %781
        %v783 = vrcp.pop %v752
        %v784 = vrcp.pop %v754
        %v785 = vrcp.pop %v756
        %v786 = vrcp.pop %v758
        %v787 = vrcp.pop %v760
        %v788 = vrcp.pop %v762
        %v789 = vrcp.pop %v764
        %v790 = vrcp.pop %v766
        %v791 = vrcp.pop %v768
        %v792 = vrcp.pop %v770
        %v793 = vrcp.pop %v772
        %v794 = vrcp.pop %v774
        %v795 = vrcp.pop %v776
        %v796 = vrcp.pop %v778
        %v797 = vrcp.pop %v780
        %v798 = vrcp.pop %v782
        %v799 = vmul.f32 %v720, %v783
        %v800 = vmul.f32 %v722, %v784
        %v801 = vmul.f32 %v724, %v785
        %v802 = vmul.f32 %v726, %v786
        %v803 = vmul.f32 %v728, %v787
        %v804 = vmul.f32 %v730, %v788
        %v805 = vmul.f32 %v732, %v789
        %v806 = vmul.f32 %v734, %v790
        %v807 = vmul.f32 %v736, %v791
        %v808 = vmul.f32 %v738, %v792
        %v809 = vmul.f32 %v740, %v793
        %v810 = vmul.f32 %v742, %v794
        %v811 = vmul.f32 %v744, %v795
        %v812 = vmul.f32 %v746, %v796
        %v813 = vmul.f32 %v748, %v797
        %v814 = vmul.f32 %v750, %v798
        %s815 = sshra.s32 %s531, 7
        %s816 = sand.u32 %s531, 127
        %s817 = smul.addr %s815, 4
        %s818 = scalar_lea.vmem [#allocation4], %s817
        %v819 = vld [vmem:[%s818] sm:$0xf]
        %v820 = vld [vmem:[%s818 + $0x4] sm:$0xf]
        %v821 = vld [vmem:[%s818 + $0x8] sm:$0xf]
        %v822 = vld [vmem:[%s818 + $0xc] sm:$0xf]
        %v823 = vld [vmem:[#allocation5] sm:$0xff]
        %v824 = vld [vmem:[#allocation5 + $0x8] sm:$0xff]
        %v825 = vld [vmem:[#allocation5 + $0x10] sm:$0xff]
        %v826 = vld [vmem:[#allocation5 + $0x18] sm:$0xff]
        %v827 = vpack.c.bf16 %v800, %v799
        %v828 = vpack.c.bf16 %v802, %v801
        %v829 = vpack.c.bf16 %v804, %v803
        %v830 = vpack.c.bf16 %v806, %v805
        %v831 = vpack.c.bf16 %v808, %v807
        %v832 = vpack.c.bf16 %v810, %v809
        %v833 = vpack.c.bf16 %v812, %v811
        %v834 = vpack.c.bf16 %v814, %v813
        %v839 = vunpack.c.l.b16 %v819
        %v840 = vunpack.c.l.b16 %v820
        %v841 = vunpack.c.l.b16 %v821
        %v842 = vunpack.c.l.b16 %v822
        %v843 = vpack.c.b16 %v840, %v839
        %v844 = vpack.c.b16 %v842, %v841
        %847 = vmatpush.bf16.msra.mxu0 %v834
        %848 = vmatpush.bf16.msra.mxu0 %v833
        %849 = vmatpush.bf16.msra.mxu0 %v832
        %850 = vmatpush.bf16.msra.mxu0 %v831
        %851 = vmatpush.bf16.msra.mxu0 %v830
        %852 = vmatpush.bf16.msra.mxu0 %v829
        %853 = vmatpush.bf16.msra.mxu0 %v828
        %854 = vmatpush.bf16.msra.mxu0 %v827
        %855 = vmatmul.bf16.gmra.mxu0 %v843
        %v856 = vpop.f32.mrf.mxu0
        %v857 = vadd.f32 0.0, %v856
        %v858 = vpop.f32.mrf.mxu0
        %v859 = vadd.f32 0.0, %v858
        %860 = vmatmul.bf16.gmra.mxu0 %v844
        %v861 = vpop.f32.mrf.mxu0
        %v862 = vadd.f32 0.0, %v861
        %v863 = vpop.f32.mrf.mxu0
        %v864 = vadd.f32 0.0, %v863
        %865 = vdwg.mxu0
        %v866 = vadd.f32 %v823, %v857
        %v867 = vadd.f32 %v824, %v859
        %v868 = vadd.f32 %v825, %v862
        %v869 = vadd.f32 %v826, %v864
        %870 = vst [vmem:[#allocation5] sm:$0xff] %v866
        %871 = vst [vmem:[#allocation5 + $0x8] sm:$0xff] %v867
        %872 = vst [vmem:[#allocation5 + $0x10] sm:$0xff] %v868
        %873 = vst [vmem:[#allocation5 + $0x18] sm:$0xff] %v869
        // Predicated region
        $region57: #{tpu_custom_call.1} parent=39 // pred_check
          %p874 = pneg %p368
        $region58: #{tpu_custom_call.1} parent=39 // pred_check_branch
          %876 = sbr.rel (%p874) target = $region60
        $region59: #{tpu_custom_call.1} parent=39 // pred_region
          %v877 = vld [vmem:[#allocation11] sm:$0xff]
          %v878 = vld [vmem:[#allocation11 + $0x8] sm:$0xff]
          %v879 = vld [vmem:[#allocation11 + $0x10] sm:$0xff]
          %v880 = vld [vmem:[#allocation11 + $0x18] sm:$0xff]
          %v881 = vpack.c.bf16 %v878, %v877
          %v882 = vpack.c.bf16 %v880, %v879
          %v883 = vld [vmem:[#allocation5] sm:$0xff]
          %v884 = vld [vmem:[#allocation5 + $0x8] sm:$0xff]
          %v885 = vld [vmem:[#allocation5 + $0x10] sm:$0xff]
          %v886 = vld [vmem:[#allocation5 + $0x18] sm:$0xff]
          %v887 = vpack.c.bf16 %v884, %v883
          %v888 = vpack.c.bf16 %v886, %v885
          %vm889 = vcmask 261120
          %v891 = vsel %vm889, %v881, 0
          %v894 = vsel %vm889, %v882, 0
          %896 = vmatpush.bf16.msra.mxu0 0
          %897 = vmatpush.bf16.msra.mxu0 0
          %898 = vmatpush.bf16.msra.mxu0 0
          %899 = vmatpush.bf16.msra.mxu0 0
          %900 = vmatpush.bf16.msra.mxu0 0
          %901 = vmatpush.bf16.msra.mxu0 0
          %902 = vmatpush.bf16.msra.mxu0 %v888
          %903 = vmatpush.bf16.msra.mxu0 %v887
          %904 = vmatmul.bf16.gmra.mxu0 %v891
          %v905 = vpop.f32.mrf.mxu0
          %v906 = vadd.f32 0.0, %v905
          %v907 = vpop.f32.mrf.mxu0
          %v908 = vadd.f32 0.0, %v907
          %909 = vmatmul.bf16.gmra.mxu0 %v894
          %v910 = vpop.f32.mrf.mxu0
          %v911 = vadd.f32 0.0, %v910
          %v912 = vpop.f32.mrf.mxu0
          %v913 = vadd.f32 0.0, %v912
          %914 = vdwg.mxu0
          %915 = vst [vmem:[%s342] sm:$0xff] %v906
          %916 = vst [vmem:[%s342 + $0x8] sm:$0xff] %v908
          %917 = vst [vmem:[%s342 + $0x10] sm:$0xff] %v911
          %918 = vst [vmem:[%s342 + $0x18] sm:$0xff] %v913
          %919 = vadd.xlane.f32.xlu0 %v906
          %v920 = vpop.xlane.xlu0 %919
          %921 = vadd.xlane.f32.xlu0 %v908
          %v922 = vpop.xlane.xlu0 %921
          %923 = vadd.xlane.f32.xlu0 %v911
          %v924 = vpop.xlane.xlu0 %923
          %925 = vadd.xlane.f32.xlu0 %v913
          %v926 = vpop.xlane.xlu0 %925
          %vm927 = vcmask 7168
          %928 = vst.msk [vmem:[%s361] sm:$0xff] %vm927, %v920
          %929 = vst.msk [vmem:[%s361 + $0x8] sm:$0xff] %vm927, %v922
          %930 = vst.msk [vmem:[%s361 + $0x10] sm:$0xff] %vm927, %v924
          %931 = vst.msk [vmem:[%s361 + $0x18] sm:$0xff] %vm927, %v926
          %v932 = vmul.f32 %v906, %v906
          %v933 = vmul.f32 %v908, %v908
          %v934 = vmul.f32 %v911, %v911
          %v935 = vmul.f32 %v913, %v913
          %936 = vadd.xlane.f32.xlu0 %v932
          %v937 = vpop.xlane.xlu0 %936
          %938 = vadd.xlane.f32.xlu0 %v933
          %v939 = vpop.xlane.xlu0 %938
          %940 = vadd.xlane.f32.xlu0 %v934
          %v941 = vpop.xlane.xlu0 %940
          %942 = vadd.xlane.f32.xlu0 %v935
          %v943 = vpop.xlane.xlu0 %942
          %944 = vst.msk [vmem:[%s366] sm:$0xff] %vm927, %v937
          %945 = vst.msk [vmem:[%s366 + $0x8] sm:$0xff] %vm927, %v939
          %946 = vst.msk [vmem:[%s366 + $0x10] sm:$0xff] %vm927, %v941
          %947 = vst.msk [vmem:[%s366 + $0x18] sm:$0xff] %vm927, %v943
        $region60: #{tpu_custom_call.1} parent=39 // pred_fallthru
          _
        %s948 = sand.u32 %s156, 1
        %s949 = scalar_lea.sflag [#allocation8], %s948
        %s950 = sand.u32 %s156, 1
        %s951 = smul.addr %s950, 32
        %s952 = scalar_lea.vmem [#allocation12], %s951
        %p953 = scmp.lt.s32.totalorder %s30, 1
        %s954 = scalar_select %p953, %s30, 1
        %s955 = smul.addr %s954, 4
        %s956 = smul.addr %s955, 8
        %s957 = scalar_lea.vmem %s6, %s956
        %p958 = scmp.lt.s32.totalorder %s30, 1
        %s959 = scalar_select %p958, %s30, 1
        %s960 = smul.addr %s959, 4
        %s961 = smul.addr %s960, 8
        %s962 = scalar_lea.vmem %s7, %s961
        // Predicated region
        $region61: #{tpu_custom_call.1} parent=39 // pred_check
          %p963 = pneg %p166
        $region62: #{tpu_custom_call.1} parent=39 // pred_check_branch
          %965 = sbr.rel (%p963) target = $region64
        $region63: #{tpu_custom_call.1} parent=39 // pred_region
          %967 = vsyncadd %s949, 0
          %s968 = smul.addr %s30, 4
          %s969 = smul.addr %s968, 8
          %s970 = scalar_lea.hbm %s5, %s969
          %s971 = sshll.u32 %s952, 4
          %s972 = int_to_ptr.vmem [resolvable:$true] %s971
          %s973 = sshll.u32 %s970, 4
          %s974 = int_to_ptr.hbm [resolvable:$true] %s973
          %979 = dma.vmem_to_hbm [thread:$0]  %s972, 512, %s974, %s949, 128, 128, 8
        $region64: #{tpu_custom_call.1} parent=39 // pred_fallthru
          _
        // Predicated region
        $region65: #{tpu_custom_call.1} parent=39 // pred_check
          %p980 = pneg %p192
        $region66: #{tpu_custom_call.1} parent=39 // pred_check_branch
          %982 = sbr.rel (%p980) target = $region68
        $region67: #{tpu_custom_call.1} parent=39 // pred_region
          _
        $region68: #{tpu_custom_call.1} parent=39 // pred_fallthru
          _
        // Predicated region
        $region69: #{tpu_custom_call.1} parent=39 // pred_check
          %p983 = pneg %p218
        $region70: #{tpu_custom_call.1} parent=39 // pred_check_branch
          %985 = sbr.rel (%p983) target = $region72
        $region71: #{tpu_custom_call.1} parent=39 // pred_region
          _
        $region72: #{tpu_custom_call.1} parent=39 // pred_fallthru
          _
      $region40: #{tpu_custom_call.1} parent=5 // pred_fallthru
        _
      %p986 = scmp.le.s32.totalorder 2, %s21
      // Predicated region
      $region73: #{tpu_custom_call.1} parent=5 // pred_check
        %p987 = pneg %p986
      $region74: #{tpu_custom_call.1} parent=5 // pred_check_branch
        %989 = sbr.rel (%p987) target = $region76
      $region75: #{tpu_custom_call.1} parent=5 // pred_region
        %s990 = ssub.s32 %s21, 2
        // Predicated region
        $region77: #{tpu_custom_call.1} parent=75 // pred_check
          %p991 = pneg %p172
        $region78: #{tpu_custom_call.1} parent=75 // pred_check_branch
          %993 = sbr.rel (%p991) target = $region80
        $region79: #{tpu_custom_call.1} parent=75 // pred_region
          %s994 = sand.u32 %s157, 1
          %s995 = scalar_lea.sflag [#allocation8], %s994
          %s996 = sand.u32 %s157, 1
          %s997 = smul.addr %s996, 32
          %s998 = scalar_lea.vmem [#allocation12], %s997
          %1000 = dma.done %s995, 512
        $region80: #{tpu_custom_call.1} parent=75 // pred_fallthru
          _
        // Predicated region
        $region81: #{tpu_custom_call.1} parent=75 // pred_check
          %p1001 = pneg %p198
        $region82: #{tpu_custom_call.1} parent=75 // pred_check_branch
          %1003 = sbr.rel (%p1001) target = $region84
        $region83: #{tpu_custom_call.1} parent=75 // pred_region
          %p1004 = scmp.lt.s32.totalorder %s32, 1
          %s1005 = scalar_select %p1004, %s32, 1
          %s1006 = smul.addr %s1005, 4
          %s1007 = smul.addr %s1006, 8
          %s1008 = scalar_lea.vmem %s6, %s1007
        $region84: #{tpu_custom_call.1} parent=75 // pred_fallthru
          _
        // Predicated region
        $region85: #{tpu_custom_call.1} parent=75 // pred_check
          %p1009 = pneg %p224
        $region86: #{tpu_custom_call.1} parent=75 // pred_check_branch
          %1011 = sbr.rel (%p1009) target = $region88
        $region87: #{tpu_custom_call.1} parent=75 // pred_region
          %p1012 = scmp.lt.s32.totalorder %s32, 1
          %s1013 = scalar_select %p1012, %s32, 1
          %s1014 = smul.addr %s1013, 4
          %s1015 = smul.addr %s1014, 8
          %s1016 = scalar_lea.vmem %s7, %s1015
        $region88: #{tpu_custom_call.1} parent=75 // pred_fallthru
          _
      $region76: #{tpu_custom_call.1} parent=5 // pred_fallthru
        _
    $region6: #{tpu_custom_call.1} parent=1 // loop_footer
      %s25 = sadd.s32 1, %s21
    $region7: #{tpu_custom_call.1} parent=1 // loop_footer_branch
      %20 = sbr.rel target = $region3
    $region8: #{tpu_custom_call.1} parent=1 // loop_exit
      _
    %1017 = vsyncpa [#allocation7], 1
    %s1018 = scalar_lea.sflag [#allocation7], 1
    %1019 = vsyncpa %s1018, 1
    %1020 = vsyncpa [#allocation10], 1
    %1021 = vsyncpa [#allocation8], 1
    %s1022 = scalar_lea.sflag [#allocation8], 1
    %1023 = vsyncpa %s1022, 1

</llo_original>
